<compile_context>
chip_gen: v6e
topology: v6e:2x2x1
jax: 0.10.0
libtpu: 0.0.40
codegen_flags: <defaults>
</compile_context>

<pallas_src>
import jax
import jax.numpy as jnp
from jax.experimental import pallas as pl
from jax.experimental.pallas import tpu as pltpu


def _make_scaler_kernel(has_mean: bool, has_std: bool, n_rows: int):
    """Build a kernel normalizing one (N, TD) column block.

    has_mean / has_std: whether that statistic arrives as an extra (1, TD)
    input ref.  Anything missing is computed in-kernel from the block, which
    is exact because each block spans the full batch axis N.
    """

    def kernel(*refs):
        idx = 0
        x_ref = refs[idx]; idx += 1
        mean_ref = None
        std_ref = None
        if has_mean:
            mean_ref = refs[idx]; idx += 1
        if has_std:
            std_ref = refs[idx]; idx += 1
        o_ref = refs[idx]

        x = x_ref[...].astype(jnp.float32)                      # (N, TD)
        n = jnp.float32(n_rows)

        mean_int = None
        if (not has_mean) or (not has_std):
            # One cross-sublane reduction for the sum; no extra centered pass.
            mean_int = jnp.sum(x, axis=0, keepdims=True) / n    # (1, TD)

        mean = mean_ref[...].astype(jnp.float32) if has_mean else mean_int

        if has_std:
            std = std_ref[...].astype(jnp.float32)              # (1, TD)
            inv_std = pl.reciprocal(std, approx=False)          # tiny row only
        else:
            # Single-sweep variance: var = (sum(x^2) - n*mean^2) / (n - 1).
            # Uses the *global* N (static), never a per-block size.
            sumsq = jnp.sum(x * x, axis=0, keepdims=True)
            denom = jnp.float32(max(n_rows - 1, 1))             # torch.std ddof=1
            var = (sumsq - n * mean_int * mean_int) / denom
            inv_std = jax.lax.rsqrt(var)                        # EUP, ~free

        # Broadcast subtract + multiply: cheap VPU work, store-slot bound.
        o_ref[...] = ((x - mean) * inv_std).astype(o_ref.dtype)

    return kernel


def _pick_tile_d(n_rows: int, d: int) -> int:
    """Pick a lane-axis tile size that keeps the pipeline inside VMEM.

    Budget the double-buffered input + output blocks (accounted in f32, the
    compute precision) well under the smallest scoped-VMEM limit across
    generations (v7x), leaving headroom for the in-kernel f32 working set.
    """
    budget_bytes = 16 * 1024 * 1024
    # 2 pipeline buffers x (in + out) x 4 bytes per element.
    td = budget_bytes // (4 * n_rows * 4)
    td = (td // 128) * 128
    if td <= 0:
        td = 128  # extremely tall N: fall back to the narrowest legal tile
    if d <= 128 or td >= d:
        return d          # full-D block (required when D < 128)
    return min(td, 2048)  # mem-bound kernels plateau around 512-2048 lanes


def standard_scaler(x, x_mean=None, x_std=None, tile_d=None):
    """Pallas-backed StandardScaler.forward.

    x: (N, D).  x_mean / x_std: optional overrides, shape (D,) or (1, D).
    Returns (x - mean) / std with the same shape/dtype as x.
    """
    N, D = x.shape

    if tile_d is None:
        td = _pick_tile_d(N, D)
    else:
        # Honor an explicit tile, but keep it legal: multiple of 128 or full D.
        td = D if tile_d >= D else max(128, (tile_d // 128) * 128)

    grid = (pl.cdiv(D, td),)

    has_mean = x_mean is not None
    has_std = x_std is not None

    in_specs = [pl.BlockSpec((N, td), lambda j: (0, j))]
    args = [x]
    if has_mean:
        x_mean = jnp.reshape(jnp.asarray(x_mean, jnp.float32), (1, D))
        in_specs.append(pl.BlockSpec((1, td), lambda j: (0, j)))
        args.append(x_mean)
    if has_std:
        x_std = jnp.reshape(jnp.asarray(x_std, jnp.float32), (1, D))
        in_specs.append(pl.BlockSpec((1, td), lambda j: (0, j)))
        args.append(x_std)

    kernel = _make_scaler_kernel(has_mean, has_std, N)

    return pl.pallas_call(
        kernel,
        out_shape=jax.ShapeDtypeStruct((N, D), x.dtype),
        grid=grid,
        in_specs=in_specs,
        out_specs=pl.BlockSpec((N, td), lambda j: (0, j)),
        compiler_params=pltpu.CompilerParams(
            dimension_semantics=("parallel",),       # D tiles independent -> megacore on v7x
            vmem_limit_bytes=48 * 1024 * 1024,       # headroom under v7x's 64 MiB
        ),
    )(*args)


if __name__ == "__main__":
    key = jax.random.PRNGKey(0)

    # Small shape consistent with the module: batch of feature vectors.
    N, D = 8, 32
    x = jax.random.normal(key, (N, D), dtype=jnp.float32) * 3.0 + 1.5

    mean_ref = jnp.mean(x, axis=0, keepdims=True)
    std_ref = jnp.std(x, axis=0, keepdims=True, ddof=1)
    expected = (x - mean_ref) / std_ref

    # Path 1: kernel computes mean and std internally (fused, single HBM read).
    out1 = standard_scaler(x)
    jax.block_until_ready(out1)
    assert jnp.allclose(out1, expected, atol=1e-4, rtol=1e-4)

    # Path 2: both statistics supplied by the caller.
    out2 = standard_scaler(x, x_mean=mean_ref, x_std=std_ref)
    jax.block_until_ready(out2)
    assert jnp.allclose(out2, expected, atol=1e-4, rtol=1e-4)

    # Path 3: only mean supplied -> std still computed in-kernel.
    custom_mean = mean_ref + 0.5
    out3 = standard_scaler(x, x_mean=custom_mean)
    jax.block_until_ready(out3)
    assert jnp.allclose(out3, (x - custom_mean) / std_ref, atol=1e-4, rtol=1e-4)

    # Path 4: only std supplied -> mean still computed in-kernel.
    custom_std = std_ref * 2.0
    out4 = standard_scaler(x, x_std=custom_std)
    jax.block_until_ready(out4)
    assert jnp.allclose(out4, (x - mean_ref) / custom_std, atol=1e-4, rtol=1e-4)

    # Exercise the multi-tile (D-tiled, pipelined) path with a modest shape.
    N2, D2 = 16, 384
    x2 = jax.random.normal(jax.random.PRNGKey(1), (N2, D2), dtype=jnp.float32) * 2.0 - 0.7
    m2 = jnp.mean(x2, axis=0, keepdims=True)
    s2 = jnp.std(x2, axis=0, keepdims=True, ddof=1)
    out5 = standard_scaler(x2, tile_d=128)            # grid = (3,)
    jax.block_until_ready(out5)
    assert jnp.allclose(out5, (x2 - m2) / s2, atol=1e-4, rtol=1e-4)
    out6 = standard_scaler(x2, x_mean=m2, x_std=s2, tile_d=128)
    jax.block_until_ready(out6)
    assert jnp.allclose(out6, (x2 - m2) / s2, atol=1e-4, rtol=1e-4)

    print("KERNEL_OK")
</pallas_src>

<mosaic_0001>
module attributes {stable_mosaic.version = 11 : i64} {
  func.func @kernel(%arg0: i32, %arg1: memref<8x32xf32, #tpu.memory_space<vmem>>, %arg2: memref<8x32xf32, #tpu.memory_space<vmem>>) attributes {dimension_semantics = [#tpu.dimension_semantics<parallel>], iteration_bounds = array<i64: 1>, scalar_prefetch = 0 : i64, scratch_operands = 0 : i64, tpu.core_type = #tpu.core_type<tc>, window_params = [{transform_indices = @transform_0, window_bounds = array<i64: 8, 32>}, {transform_indices = @transform_1, window_bounds = array<i64: 8, 32>}]} {
    %c0 = arith.constant 0 : index
    %c0_0 = arith.constant 0 : index
    %0 = vector.load %arg1[%c0, %c0_0] : memref<8x32xf32, #tpu.memory_space<vmem>>, vector<8x32xf32>
    %cst = arith.constant dense<0.000000e+00> : vector<32xf32>
    %1 = vector.multi_reduction <add>, %0, %cst [0] : vector<8x32xf32> to vector<32xf32>
    %2 = vector.shape_cast %1 : vector<32xf32> to vector<1x32xf32>
    %cst_1 = arith.constant 8.000000e+00 : f32
    %3 = vector.broadcast %cst_1 : f32 to vector<1x32xf32>
    %4 = arith.divf %2, %3 : vector<1x32xf32>
    %5 = arith.mulf %0, %0 : vector<8x32xf32>
    %cst_2 = arith.constant dense<0.000000e+00> : vector<32xf32>
    %6 = vector.multi_reduction <add>, %5, %cst_2 [0] : vector<8x32xf32> to vector<32xf32>
    %7 = vector.shape_cast %6 : vector<32xf32> to vector<1x32xf32>
    %cst_3 = arith.constant 8.000000e+00 : f32
    %8 = vector.broadcast %cst_3 : f32 to vector<1x32xf32>
    %9 = arith.mulf %8, %4 : vector<1x32xf32>
    %10 = arith.mulf %9, %4 : vector<1x32xf32>
    %11 = arith.subf %7, %10 : vector<1x32xf32>
    %cst_4 = arith.constant 7.000000e+00 : f32
    %12 = vector.broadcast %cst_4 : f32 to vector<1x32xf32>
    %13 = arith.divf %11, %12 : vector<1x32xf32>
    %14 = math.rsqrt %13 : vector<1x32xf32>
    %15 = vector.broadcast %4 : vector<1x32xf32> to vector<8x32xf32>
    %16 = arith.subf %0, %15 : vector<8x32xf32>
    %17 = vector.broadcast %14 : vector<1x32xf32> to vector<8x32xf32>
    %18 = arith.mulf %16, %17 : vector<8x32xf32>
    %c0_5 = arith.constant 0 : index
    %c0_6 = arith.constant 0 : index
    %19 = vector.load %arg2[%c0_5, %c0_6] : memref<8x32xf32, #tpu.memory_space<vmem>>, vector<8x32xf32>
    tpu.vector_store %arg2[%c0_5, %c0_6], %18 {strides = array<i32>} : memref<8x32xf32, #tpu.memory_space<vmem>>, vector<8x32xf32>,
    return
  }
  func.func @transform_0(%arg0: i32) -> (i32, i32) {
    %c0_i32 = arith.constant 0 : i32
    %c0_i32_0 = arith.constant 0 : i32
    return %c0_i32, %arg0 : i32, i32
  }
  func.func @transform_1(%arg0: i32) -> (i32, i32) {
    %c0_i32 = arith.constant 0 : i32
    %c0_i32_0 = arith.constant 0 : i32
    return %c0_i32, %arg0 : i32, i32
  }
}

</mosaic_0001>

<llo_original>
// kernel: tpu_custom_call.1
$region0: #{tpu_custom_call.1}
  #allocation0 [shape = 'u32[]', space=smem, size = 0x4, offset = 0x4, fixed_abs, tag = 'smem constant byte address 0x4 - core index']
  #allocation1 [shape = 'u32[144,128]{1,0:T(1,128)}', space=vmem, size = 0x12000, scoped, tag = 'internal scratch']
  %s0 = inlined_call_operand.hbm [shape: f32[8,32], index: 0, kind: input, shape index: {}]
  %s1 = inlined_call_operand.hbm [shape: f32[8,32], index: 1, kind: output, shape index: {}]
  %s2 = sld [smem:[#allocation0]]
  $region18: #{tpu_custom_call.1} parent=0
    _
  %s4 = ssub.s32 1, %s2
  %s5 = scalar_select 0, %s4, %s2
  $region1: #{tpu_custom_call.1} parent=0
    #allocation2 [shape = 'u8[4096]{0}', space=vmem, size = 0x1000, scoped, tag = 'input window, operand 0, single buffered']
    #allocation3 [shape = 's32[1]{0}', space=sflag, size = 0x4, scoped, tag = 'scoped memory for tpu_custom_call.1']
    #allocation4 [shape = 's32[1]{0}', space=sflag, size = 0x4, scoped, tag = 'scoped memory for tpu_custom_call.1']
    #allocation5 [shape = 'u8[4096]{0}', space=vmem, size = 0x1000, scoped, tag = 'output window, operand 0, single buffered']
    %6 = vsyncpa [#allocation3], 0
    %7 = vsyncpa [#allocation4], 0
    // Predicated region
    $region2: #{tpu_custom_call.1} parent=1 // pred_check
      _
    $region3: #{tpu_custom_call.1} parent=1 // pred_check_branch
      %9 = sbr.rel (0) target = $region5
    $region4: #{tpu_custom_call.1} parent=1 // pred_region
      %s11 = ssub.s32 128, 128
      %12 = vsyncadd [#allocation3], %s11
      %s14 = sshll.u32 [#allocation2], 4
      %s15 = int_to_ptr.vmem [resolvable:$true] %s14
      %17 = dma.hbm_to_vmem [thread:$0]  %s0, 128, %s15, [#allocation3]
    $region5: #{tpu_custom_call.1} parent=1 // pred_fallthru
      _
    // Predicated region
    $region6: #{tpu_custom_call.1} parent=1 // pred_check
      _
    $region7: #{tpu_custom_call.1} parent=1 // pred_check_branch
      %19 = sbr.rel (0) target = $region9
    $region8: #{tpu_custom_call.1} parent=1 // pred_region
      %20 = dma.done [#allocation3], 128
    $region9: #{tpu_custom_call.1} parent=1 // pred_fallthru
      _
    %v21 = vld [vmem:[#allocation2] sm:$0xff]
    %vm22 = vcmask 261120
    %v23 = vsel %vm22, %v21, 0.0
    %v24 = vrot.slane %v23, 4
    %v25 = vadd.f32 %v23, %v24
    %v26 = vrot.slane %v25, 2
    %v27 = vadd.f32 %v25, %v26
    %v28 = vrot.slane %v27, 1
    %v29 = vadd.f32 %v27, %v28
    %v30 = vrcp.pop 8.0
    %v31 = vmul.f32 %v29, %v30
    %v32 = vmul.f32 %v21, %v21
    %v33 = vsel %vm22, %v32, 0.0
    %v34 = vrot.slane %v33, 4
    %v35 = vadd.f32 %v33, %v34
    %v36 = vrot.slane %v35, 2
    %v37 = vadd.f32 %v35, %v36
    %v38 = vrot.slane %v37, 1
    %v39 = vadd.f32 %v37, %v38
    %v40 = vmul.f32 %v31, 8.0
    %v41 = vmul.f32 %v40, %v31
    %v42 = vsub.f32 %v39, %v41
    %v43 = vrcp.pop 7.0
    %v44 = vmul.f32 %v42, %v43
    %v45 = vrsqrt.pop %v44
    %v46 = vsub.f32 %v21, %v31
    %v47 = vmul.f32 %v46, %v45
    %48 = vst.msk [vmem:[#allocation5] sm:$0xff] %vm22, %v47
    // Predicated region
    $region10: #{tpu_custom_call.1} parent=1 // pred_check
      _
    $region11: #{tpu_custom_call.1} parent=1 // pred_check_branch
      %50 = sbr.rel (0) target = $region13
    $region12: #{tpu_custom_call.1} parent=1 // pred_region
      %s52 = ssub.s32 128, 128
      %53 = vsyncadd [#allocation4], %s52
      %s55 = sshll.u32 [#allocation5], 4
      %s56 = int_to_ptr.vmem [resolvable:$true] %s55
      %58 = dma.vmem_to_hbm [thread:$0]  %s56, 128, %s1, [#allocation4]
    $region13: #{tpu_custom_call.1} parent=1 // pred_fallthru
      _
    // Predicated region
    $region14: #{tpu_custom_call.1} parent=1 // pred_check
      _
    $region15: #{tpu_custom_call.1} parent=1 // pred_check_branch
      %60 = sbr.rel (0) target = $region17
    $region16: #{tpu_custom_call.1} parent=1 // pred_region
      %61 = dma.done [#allocation4], 128
    $region17: #{tpu_custom_call.1} parent=1 // pred_fallthru
      _
    %62 = vsyncpa [#allocation3], 1
    %63 = vsyncpa [#allocation4], 1

</llo_original>
